<compile_context>
chip_gen: v6e
topology: v6e:2x2x1
jax: 0.10.0
libtpu: 0.0.40
codegen_flags: <defaults>
</compile_context>

<pallas_src>
import functools

import jax
import jax.numpy as jnp
from jax import lax
from jax.experimental import pallas as pl
from jax.experimental.pallas import tpu as pltpu


def _pick_tile(full, pref, align):
    """Largest tile <= pref that divides `full` and is a multiple of `align`;
    falls back to the full extent (always a legal BlockSpec block dim)."""
    if full <= pref:
        return full
    t = (pref // align) * align
    while t >= align:
        if full % t == 0:
            return t
        t -= align
    return full


# ---------------------------------------------------------------------------
# Generic tiled linear:  y = x @ W + b   (bf16 MXU inputs, f32 accumulation)
# ---------------------------------------------------------------------------
def _linear_kernel(x_ref, w_ref, b_ref, o_ref, acc_ref):
    k = pl.program_id(2)

    @pl.when(k == 0)
    def _():
        acc_ref[...] = jnp.zeros_like(acc_ref)

    acc_ref[...] += jnp.dot(x_ref[...], w_ref[...],
                            preferred_element_type=jnp.float32)

    @pl.when(k == pl.num_programs(2) - 1)
    def _():
        o_ref[...] = (acc_ref[...] + b_ref[...]).astype(o_ref.dtype)


def linear(x2d, w, b, out_dtype, *, tm_pref=256, tn_pref=256, tk_pref=512):
    M, K = x2d.shape
    K2, Nf = w.shape
    assert K == K2
    tm = _pick_tile(M, tm_pref, 8)
    tn = _pick_tile(Nf, tn_pref, 128)
    tk = _pick_tile(K, tk_pref, 128)
    grid = (M // tm, Nf // tn, K // tk)

    return pl.pallas_call(
        _linear_kernel,
        out_shape=jax.ShapeDtypeStruct((M, Nf), out_dtype),
        grid_spec=pltpu.PrefetchScalarGridSpec(
            num_scalar_prefetch=0,
            grid=grid,
            in_specs=[
                pl.BlockSpec((tm, tk), lambda i, j, k: (i, k)),   # x tile
                pl.BlockSpec((tk, tn), lambda i, j, k: (k, j)),   # W tile
                pl.BlockSpec((1, tn), lambda i, j, k: (0, j)),    # bias tile
            ],
            out_specs=pl.BlockSpec((tm, tn), lambda i, j, k: (i, j)),
            scratch_shapes=[pltpu.VMEM((tm, tn), jnp.float32)],
        ),
        compiler_params=pltpu.CompilerParams(
            dimension_semantics=("parallel", "parallel", "arbitrary")),
    )(x2d, w, b)


# ---------------------------------------------------------------------------
# Flash attention:  grid (B, H, Nq-tiles, Nkv-tiles), online softmax
# ---------------------------------------------------------------------------
def _flash_kernel(q_ref, k_ref, v_ref, o_ref, m_sc, l_sc, acc_sc, *, scale):
    kv = pl.program_id(3)

    @pl.when(kv == 0)
    def _():
        m_sc[...] = jnp.full_like(m_sc, -jnp.inf)
        l_sc[...] = jnp.zeros_like(l_sc)
        acc_sc[...] = jnp.zeros_like(acc_sc)

    q = q_ref[0, 0]            # (tq,  hd)  bf16
    k = k_ref[0, 0]            # (tkv, hd)  bf16
    v = v_ref[0, 0]            # (tkv, hd)  bf16

    # scores = q @ k^T * scale  (contract on head_dim; no explicit transpose)
    s = lax.dot_general(q, k, dimension_numbers=(((1,), (1,)), ((), ())),
                        preferred_element_type=jnp.float32) * scale  # (tq, tkv) f32

    m_prev = m_sc[...]
    m_new = jnp.maximum(m_prev, jnp.max(s, axis=-1, keepdims=True))
    alpha = jnp.exp(m_prev - m_new)
    p = jnp.exp(s - m_new)                                           # f32 softmax math
    l_sc[...] = alpha * l_sc[...] + jnp.sum(p, axis=-1, keepdims=True)
    acc_sc[...] = alpha * acc_sc[...] + jnp.dot(
        p.astype(v.dtype), v, preferred_element_type=jnp.float32)
    m_sc[...] = m_new

    # TODO(synk): qvk_drop on the attention matrix omitted (eval-mode identity).
    @pl.when(kv == pl.num_programs(3) - 1)
    def _():
        o_ref[0, 0] = (acc_sc[...] *
                       pl.reciprocal(l_sc[...], approx=True)).astype(o_ref.dtype)


def flash_attention(q, k, v, scale, *, tq_pref=256, tkv_pref=256):
    B, H, N, hd = q.shape
    tq = _pick_tile(N, tq_pref, 8)
    tkv = _pick_tile(N, tkv_pref, 8)
    grid = (B, H, N // tq, N // tkv)

    kern = functools.partial(_flash_kernel, scale=scale)
    return pl.pallas_call(
        kern,
        out_shape=jax.ShapeDtypeStruct((B, H, N, hd), q.dtype),
        grid_spec=pltpu.PrefetchScalarGridSpec(
            num_scalar_prefetch=0,
            grid=grid,
            in_specs=[
                pl.BlockSpec((1, 1, tq, hd), lambda b, h, i, j: (b, h, i, 0)),
                pl.BlockSpec((1, 1, tkv, hd), lambda b, h, i, j: (b, h, j, 0)),
                pl.BlockSpec((1, 1, tkv, hd), lambda b, h, i, j: (b, h, j, 0)),
            ],
            out_specs=pl.BlockSpec((1, 1, tq, hd), lambda b, h, i, j: (b, h, i, 0)),
            scratch_shapes=[
                pltpu.VMEM((tq, 1), jnp.float32),   # m (running max)
                pltpu.VMEM((tq, 1), jnp.float32),   # l (running denom)
                pltpu.VMEM((tq, hd), jnp.float32),  # acc (unnormalized out)
            ],
        ),
        compiler_params=pltpu.CompilerParams(
            dimension_semantics=("parallel", "parallel", "parallel", "arbitrary")),
    )(q, k, v)


# ---------------------------------------------------------------------------
# Full forward pass (matches the PyTorch Attention module in eval mode)
# ---------------------------------------------------------------------------
def attention_forward(x, w_qvk, b_qvk, w_proj, b_proj, n_heads):
    B, N, dim = x.shape
    hd = dim // n_heads
    scale = hd ** (-0.5)

    # bf16 MXU operands (halves HBM/VMEM traffic), biases & accum stay f32.
    x_bf = x.astype(jnp.bfloat16)
    w_qvk_bf = w_qvk.astype(jnp.bfloat16)
    w_proj_bf = w_proj.astype(jnp.bfloat16)

    # 1) fused QKV projection -> (B*N, 3*dim) in bf16
    qvk = linear(x_bf.reshape(B * N, dim), w_qvk_bf, b_qvk, jnp.bfloat16)

    # 2) split heads.  NOTE: the PyTorch module unpacks q, v, k = qvk[0,1,2]
    #    after permute(2,0,3,1,4) -- chunk 1 is V and chunk 2 is K.
    qvk = qvk.reshape(B, N, 3, n_heads, hd).transpose(2, 0, 3, 1, 4)  # (3,B,H,N,hd)
    q, v, k = qvk[0], qvk[1], qvk[2]

    # 3) flash attention with online softmax -> (B, H, N, hd)
    o = flash_attention(q, k, v, scale)

    # 4) concat heads (XLA layout plumbing; keeps kernel stores lane-dense)
    o = o.transpose(0, 2, 1, 3).reshape(B * N, dim)

    # 5) output projection -> (B, N, dim)
    # TODO(synk): proj_drop omitted (eval-mode identity).
    out = linear(o, w_proj_bf, b_proj, x.dtype)
    return out.reshape(B, N, dim)


def reference_attention(x, w_qvk, b_qvk, w_proj, b_proj, n_heads):
    """Pure-JAX f32 reference matching the PyTorch forward (eval mode)."""
    B, N, dim = x.shape
    hd = dim // n_heads
    scale = hd ** (-0.5)
    qvk = x @ w_qvk + b_qvk[0]                                   # (B, N, 3*dim)
    qvk = qvk.reshape(B, N, 3, n_heads, hd).transpose(2, 0, 3, 1, 4)
    q, v, k = qvk[0], qvk[1], qvk[2]                             # (B, H, N, hd)
    s = jnp.einsum('bhqd,bhkd->bhqk', q, k) * scale
    p = jax.nn.softmax(s, axis=-1)
    o = jnp.einsum('bhqk,bhkd->bhqd', p, v)                      # (B, H, N, hd)
    o = o.transpose(0, 2, 1, 3).reshape(B, N, dim)
    return o @ w_proj + b_proj[0]


if __name__ == "__main__":
    B, N, dim = 2, 8, 32
    n_heads = 4

    key = jax.random.PRNGKey(0)
    kx, k1, k2, k3, k4 = jax.random.split(key, 5)

    x = jax.random.normal(kx, (B, N, dim), dtype=jnp.float32)
    # nn.Linear parameters stored as (in, out); biases as (1, out).
    w_qvk = jax.random.normal(k1, (dim, 3 * dim), dtype=jnp.float32) * 0.05
    b_qvk = jax.random.normal(k2, (1, 3 * dim), dtype=jnp.float32) * 0.05
    w_proj = jax.random.normal(k3, (dim, dim), dtype=jnp.float32) * 0.05
    b_proj = jax.random.normal(k4, (1, dim), dtype=jnp.float32) * 0.05

    out = attention_forward(x, w_qvk, b_qvk, w_proj, b_proj, n_heads)
    out = jax.block_until_ready(out)

    ref = reference_attention(x, w_qvk, b_qvk, w_proj, b_proj, n_heads)
    assert out.shape == (B, N, dim)
    # bf16 MXU operands -> relax tolerance vs the f32 reference.
    assert jnp.allclose(out, ref, atol=2e-2, rtol=2e-2), "mismatch vs reference"

    print("KERNEL_OK")
</pallas_src>

<mosaic_0001>
module attributes {stable_mosaic.version = 11 : i64} {
  func.func @_linear_kernel(%arg0: i32, %arg1: i32, %arg2: i32, %arg3: memref<16x32xbf16, #tpu.memory_space<vmem>>, %arg4: memref<32x96xbf16, #tpu.memory_space<vmem>>, %arg5: memref<1x96xf32, #tpu.memory_space<vmem>>, %arg6: memref<16x96xbf16, #tpu.memory_space<vmem>>, %arg7: memref<16x96xf32, #tpu.memory_space<vmem>>) attributes {dimension_semantics = [#tpu.dimension_semantics<parallel>, #tpu.dimension_semantics<parallel>, #tpu.dimension_semantics<arbitrary>], iteration_bounds = array<i64: 1, 1, 1>, scalar_prefetch = 0 : i64, scratch_operands = 1 : i64, tpu.core_type = #tpu.core_type<tc>, window_params = [{transform_indices = @transform_0, window_bounds = array<i64: 16, 32>}, {transform_indices = @transform_1, window_bounds = array<i64: 32, 96>}, {transform_indices = @transform_2, window_bounds = array<i64: 1, 96>}, {transform_indices = @transform_3, window_bounds = array<i64: 16, 96>}]} {
    %c0_i32 = arith.constant 0 : i32
    %0 = arith.cmpi eq, %arg2, %c0_i32 : i32
    %1 = arith.extui %0 : i1 to i32
    %c0_i32_0 = arith.constant 0 : i32
    %2 = arith.cmpi ne, %1, %c0_i32_0 : i32
    scf.if %2 {
      %cst_10 = arith.constant 0.000000e+00 : f32
      %12 = vector.broadcast %cst_10 : f32 to vector<16x96xf32>
      %c0_11 = arith.constant 0 : index
      %c0_12 = arith.constant 0 : index
      %13 = vector.load %arg7[%c0_11, %c0_12] : memref<16x96xf32, #tpu.memory_space<vmem>>, vector<16x96xf32>
      tpu.vector_store %arg7[%c0_11, %c0_12], %12 {strides = array<i32>} : memref<16x96xf32, #tpu.memory_space<vmem>>, vector<16x96xf32>,
    } else {
    }
    %c0 = arith.constant 0 : index
    %c0_1 = arith.constant 0 : index
    %3 = vector.load %arg7[%c0, %c0_1] : memref<16x96xf32, #tpu.memory_space<vmem>>, vector<16x96xf32>
    %c0_2 = arith.constant 0 : index
    %c0_3 = arith.constant 0 : index
    %4 = vector.load %arg3[%c0_2, %c0_3] : memref<16x32xbf16, #tpu.memory_space<vmem>>, vector<16x32xbf16>
    %c0_4 = arith.constant 0 : index
    %c0_5 = arith.constant 0 : index
    %5 = vector.load %arg4[%c0_4, %c0_5] : memref<32x96xbf16, #tpu.memory_space<vmem>>, vector<32x96xbf16>
    %cst = arith.constant dense<0.000000e+00> : vector<16x96xf32>
    %6 = tpu.matmul %4, %5, %cst {dimension_numbers = #tpu.dot_dimension_numbers<[1], [0], [0], [1], [0, 0, 1, 1], [], []>} : vector<16x32xbf16>, vector<32x96xbf16>, vector<16x96xf32> -> vector<16x96xf32>
    %7 = arith.addf %3, %6 : vector<16x96xf32>
    %c0_6 = arith.constant 0 : index
    %c0_7 = arith.constant 0 : index
    %8 = vector.load %arg7[%c0_6, %c0_7] : memref<16x96xf32, #tpu.memory_space<vmem>>, vector<16x96xf32>
    tpu.vector_store %arg7[%c0_6, %c0_7], %7 {strides = array<i32>} : memref<16x96xf32, #tpu.memory_space<vmem>>, vector<16x96xf32>,
    %c0_i32_8 = arith.constant 0 : i32
    %9 = arith.cmpi eq, %arg2, %c0_i32_8 : i32
    %10 = arith.extui %9 : i1 to i32
    %c0_i32_9 = arith.constant 0 : i32
    %11 = arith.cmpi ne, %10, %c0_i32_9 : i32
    scf.if %11 {
      %c0_10 = arith.constant 0 : index
      %c0_11 = arith.constant 0 : index
      %12 = vector.load %arg7[%c0_10, %c0_11] : memref<16x96xf32, #tpu.memory_space<vmem>>, vector<16x96xf32>
      %c0_12 = arith.constant 0 : index
      %c0_13 = arith.constant 0 : index
      %13 = vector.load %arg5[%c0_12, %c0_13] : memref<1x96xf32, #tpu.memory_space<vmem>>, vector<1x96xf32>
      %14 = vector.broadcast %13 : vector<1x96xf32> to vector<16x96xf32>
      %15 = arith.addf %12, %14 : vector<16x96xf32>
      %16 = arith.truncf %15 : vector<16x96xf32> to vector<16x96xbf16>
      %c0_14 = arith.constant 0 : index
      %c0_15 = arith.constant 0 : index
      %17 = vector.load %arg6[%c0_14, %c0_15] : memref<16x96xbf16, #tpu.memory_space<vmem>>, vector<16x96xbf16>
      tpu.vector_store %arg6[%c0_14, %c0_15], %16 {strides = array<i32>} : memref<16x96xbf16, #tpu.memory_space<vmem>>, vector<16x96xbf16>,
    } else {
    }
    return
  }
  func.func @transform_0(%arg0: i32, %arg1: i32, %arg2: i32) -> (i32, i32) {
    %c0_i32 = arith.constant 0 : i32
    return %arg0, %arg2 : i32, i32
  }
  func.func @transform_1(%arg0: i32, %arg1: i32, %arg2: i32) -> (i32, i32) {
    %c0_i32 = arith.constant 0 : i32
    return %arg2, %arg1 : i32, i32
  }
  func.func @transform_2(%arg0: i32, %arg1: i32, %arg2: i32) -> (i32, i32) {
    %c0_i32 = arith.constant 0 : i32
    %c0_i32_0 = arith.constant 0 : i32
    return %c0_i32, %arg1 : i32, i32
  }
  func.func @transform_3(%arg0: i32, %arg1: i32, %arg2: i32) -> (i32, i32) {
    %c0_i32 = arith.constant 0 : i32
    return %arg0, %arg1 : i32, i32
  }
}

</mosaic_0001>

<llo_original>
// kernel: tpu_custom_call.1
$region0: #{tpu_custom_call.1}
  #allocation0 [shape = 'u32[]', space=smem, size = 0x4, offset = 0x4, fixed_abs, tag = 'smem constant byte address 0x4 - core index']
  #allocation1 [shape = 'u32[144,128]{1,0:T(1,128)}', space=vmem, size = 0x12000, scoped, tag = 'internal scratch']
  #allocation2 [shape = 'f32[16,96]{1,0:T(8,128)}', space=vmem, size = 0x2000, scoped, tag = 'scratch operand']
  %s0 = inlined_call_operand.hbm [shape: bf16[16,32], index: 0, kind: input, shape index: {}]
  %s1 = inlined_call_operand.hbm [shape: bf16[32,96], index: 1, kind: input, shape index: {}]
  %s2 = inlined_call_operand.vmem [shape: f32[1,96], index: 2, kind: input, shape index: {}]
  %s3 = inlined_call_operand.hbm [shape: bf16[16,96], index: 3, kind: output, shape index: {}]
  %s4 = sld [smem:[#allocation0]]
  $region38: #{tpu_custom_call.1} parent=0
    _
  %s6 = ssub.s32 1, %s4
  %s7 = scalar_select 0, %s6, %s4
  $region1: #{tpu_custom_call.1} parent=0
    #allocation3 [shape = 'u8[4096]{0}', space=vmem, size = 0x1000, scoped, tag = 'input window, operand 0, single buffered']
    #allocation4 [shape = 's32[1]{0}', space=sflag, size = 0x4, scoped, tag = 'scoped memory for tpu_custom_call.1']
    #allocation5 [shape = 's32[1]{0}', space=sflag, size = 0x4, scoped, tag = 'scoped memory for tpu_custom_call.1']
    #allocation6 [shape = 'u8[8192]{0}', space=vmem, size = 0x2000, scoped, tag = 'input window, operand 1, single buffered']
    #allocation7 [shape = 's32[1]{0}', space=sflag, size = 0x4, scoped, tag = 'scoped memory for tpu_custom_call.1']
    #allocation8 [shape = 'u8[4096]{0}', space=vmem, size = 0x1000, scoped, tag = 'output window, operand 0, single buffered']
    %8 = vsyncpa [#allocation4], 0
    %9 = vsyncpa [#allocation7], 0
    %10 = vsyncpa [#allocation5], 0
    // Predicated region
    $region2: #{tpu_custom_call.1} parent=1 // pred_check
      _
    $region3: #{tpu_custom_call.1} parent=1 // pred_check_branch
      %12 = sbr.rel (0) target = $region5
    $region4: #{tpu_custom_call.1} parent=1 // pred_region
      %s14 = ssub.s32 128, 128
      %15 = vsyncadd [#allocation4], %s14
      %s16 = sshll.u32 [#allocation3], 4
      %s17 = int_to_ptr.vmem [resolvable:$true] %s16
      %22 = dma.hbm_to_vmem [thread:$0]  %s0, 128, %s17, [#allocation4], 64, 64, 4
    $region5: #{tpu_custom_call.1} parent=1 // pred_fallthru
      _
    // Predicated region
    $region6: #{tpu_custom_call.1} parent=1 // pred_check
      _
    $region7: #{tpu_custom_call.1} parent=1 // pred_check_branch
      %24 = sbr.rel (0) target = $region9
    $region8: #{tpu_custom_call.1} parent=1 // pred_region
      %s26 = ssub.s32 256, 256
      %27 = vsyncadd [#allocation7], %s26
      %s28 = sshll.u32 [#allocation6], 4
      %s29 = int_to_ptr.vmem [resolvable:$true] %s28
      %34 = dma.hbm_to_vmem [thread:$0]  %s1, 256, %s29, [#allocation7], 64, 64, 4
    $region9: #{tpu_custom_call.1} parent=1 // pred_fallthru
      _
    // Predicated region
    $region10: #{tpu_custom_call.1} parent=1 // pred_check
      _
    $region11: #{tpu_custom_call.1} parent=1 // pred_check_branch
      %36 = sbr.rel (0) target = $region13
    $region12: #{tpu_custom_call.1} parent=1 // pred_region
      _
    $region13: #{tpu_custom_call.1} parent=1 // pred_fallthru
      _
    // Predicated region
    $region14: #{tpu_custom_call.1} parent=1 // pred_check
      _
    $region15: #{tpu_custom_call.1} parent=1 // pred_check_branch
      %38 = sbr.rel (0) target = $region17
    $region16: #{tpu_custom_call.1} parent=1 // pred_region
      %39 = dma.done [#allocation4], 128
    $region17: #{tpu_custom_call.1} parent=1 // pred_fallthru
      _
    // Predicated region
    $region18: #{tpu_custom_call.1} parent=1 // pred_check
      _
    $region19: #{tpu_custom_call.1} parent=1 // pred_check_branch
      %41 = sbr.rel (0) target = $region21
    $region20: #{tpu_custom_call.1} parent=1 // pred_region
      %42 = dma.done [#allocation7], 256
    $region21: #{tpu_custom_call.1} parent=1 // pred_fallthru
      _
    %p44 = scmp.eq.s32.totalorder 0, 0
    // Predicated region
    $region22: #{tpu_custom_call.1} parent=1 // pred_check
      %p45 = pneg %p44
    $region23: #{tpu_custom_call.1} parent=1 // pred_check_branch
      %47 = sbr.rel (%p45) target = $region25
    $region24: #{tpu_custom_call.1} parent=1 // pred_region
      %vm48 = vcmask 785408
      %49 = vst.msk [vmem:[#allocation2] sm:$0xff] %vm48, 0.0
      %50 = vst.msk [vmem:[#allocation2 + $0x8] sm:$0xff] %vm48, 0.0
    $region25: #{tpu_custom_call.1} parent=1 // pred_fallthru
      _
    %v51 = vld [vmem:[#allocation2] sm:$0xff]
    %v52 = vld [vmem:[#allocation2 + $0x8] sm:$0xff]
    %v53 = vld [vmem:[#allocation3] sm:$0xf]
    %v54 = vld [vmem:[#allocation3 + $0x4] sm:$0xf]
    %v55 = vld [vmem:[#allocation6] sm:$0xf]
    %v56 = vld [vmem:[#allocation6 + $0x4] sm:$0xf]
    %v57 = vld [vmem:[#allocation6 + $0x8] sm:$0xf]
    %v58 = vld [vmem:[#allocation6 + $0xc] sm:$0xf]
    %v61 = vunpack.c.l.b16 %v53
    %v62 = vunpack.c.l.b16 %v54
    %v63 = vpack.c.b16 %v62, %v61
    %v68 = vunpack.c.l.b16 %v55
    %v69 = vunpack.c.l.b16 %v56
    %v70 = vunpack.c.l.b16 %v57
    %v71 = vunpack.c.l.b16 %v58
    %v72 = vpack.c.b16 %v69, %v68
    %v73 = vpack.c.b16 %v71, %v70
    %vm76 = vcmask 261120
    %v78 = vsel %vm76, %v63, 0
    %80 = vmatprep.subr.bf16.mxu0 0
    %81 = vmatpush1.bf16.msra.mxu0 0
    %82 = vmatprep.subr.bf16.mxu0 0
    %83 = vmatpush1.bf16.msra.mxu0 0
    %84 = vmatprep.subr.bf16.mxu0 0
    %85 = vmatpush1.bf16.msra.mxu0 0
    %86 = vmatprep.subr.bf16.mxu0 0
    %87 = vmatpush1.bf16.msra.mxu0 0
    %88 = vmatprep.subr.bf16.mxu0 0
    %89 = vmatpush1.bf16.msra.mxu0 0
    %90 = vmatprep.subr.bf16.mxu0 0
    %91 = vmatpush1.bf16.msra.mxu0 0
    %92 = vmatprep.subr.bf16.mxu0 0
    %93 = vmatpush1.bf16.msra.mxu0 %v73
    %94 = vmatprep.subr.bf16.mxu0 0
    %95 = vmatpush1.bf16.msra.mxu0 %v72
    %96 = vmatprep.subr.bf16.mxu0 0
    %97 = vmatpush2.bf16.msra.mxu0 0
    %98 = vmatprep.subr.bf16.mxu0 0
    %99 = vmatpush2.bf16.msra.mxu0 0
    %100 = vmatprep.subr.bf16.mxu0 0
    %101 = vmatpush2.bf16.msra.mxu0 0
    %102 = vmatprep.subr.bf16.mxu0 0
    %103 = vmatpush2.bf16.msra.mxu0 0
    %104 = vmatprep.subr.bf16.mxu0 0
    %105 = vmatpush2.bf16.msra.mxu0 0
    %106 = vmatprep.subr.bf16.mxu0 0
    %107 = vmatpush2.bf16.msra.mxu0 0
    %108 = vmatprep.subr.bf16.mxu0 0
    %109 = vmatpush2.bf16.msra.mxu0 0
    %110 = vmatprep.subr.bf16.mxu0 0
    %111 = vmatpush2.bf16.msra.mxu0 0
    %112 = vmatprep.mubr.bf16.mxu0 0
    %113 = vmatmul.mubr.bf16.gmra.mxu0 %v78
    %v114 = vpop.f32.mrf.mxu0
    %v115 = vadd.f32 0.0, %v114
    %v116 = vpop.f32.mrf.mxu0
    %v117 = vpop.f32.mrf.mxu0
    %v118 = vadd.f32 0.0, %v117
    %v119 = vpop.f32.mrf.mxu0
    %120 = vdwg.mxu0
    %v121 = vadd.f32 %v51, %v115
    %v122 = vadd.f32 %v52, %v118
    %vm123 = vcmask 785408
    %124 = vst.msk [vmem:[#allocation2] sm:$0xff] %vm123, %v121
    %125 = vst.msk [vmem:[#allocation2 + $0x8] sm:$0xff] %vm123, %v122
    // Predicated region
    $region26: #{tpu_custom_call.1} parent=1 // pred_check
      %p126 = pneg %p44
    $region27: #{tpu_custom_call.1} parent=1 // pred_check_branch
      %128 = sbr.rel (%p126) target = $region29
    $region28: #{tpu_custom_call.1} parent=1 // pred_region
      %v129 = vld [vmem:[#allocation2] sm:$0xff]
      %v130 = vld [vmem:[#allocation2 + $0x8] sm:$0xff]
      %v131 = vld [vmem:[%s2] sm:$0x1]
      %v133 = vlaneseq
      %v134 = vshrl.u32 %v133, 7
      %v135 = vsub.s32 0, %v134
      %v136 = vrot.slane %v131, %v135
      %v138 = vadd.f32 %v129, %v136
      %v139 = vadd.f32 %v130, %v136
      %v140 = vpack.c.bf16 %v139, %v138
      %v142 = vunpack.c.l.b16 %v140
      %v143 = vunpack.c.h.b16 %v140
      %v144 = vpack.c.b16 %v142, %v142
      %v145 = vpack.c.b16 %v143, %v143
      %vm148 = vcmask 781312
      %149 = vst.msk [vmem:[#allocation8] sm:$0xf] %vm148, %v144
      %150 = vst.msk [vmem:[#allocation8 + $0x4] sm:$0xf] %vm148, %v145
    $region29: #{tpu_custom_call.1} parent=1 // pred_fallthru
      _
    // Predicated region
    $region30: #{tpu_custom_call.1} parent=1 // pred_check
      _
    $region31: #{tpu_custom_call.1} parent=1 // pred_check_branch
      %152 = sbr.rel (0) target = $region33
    $region32: #{tpu_custom_call.1} parent=1 // pred_region
      %s154 = ssub.s32 128, 128
      %155 = vsyncadd [#allocation5], %s154
      %s156 = sshll.u32 [#allocation8], 4
      %s157 = int_to_ptr.vmem [resolvable:$true] %s156
      %162 = dma.vmem_to_hbm [thread:$0]  %s157, 128, %s3, [#allocation5], 64, 64, 4
    $region33: #{tpu_custom_call.1} parent=1 // pred_fallthru
      _
    // Predicated region
    $region34: #{tpu_custom_call.1} parent=1 // pred_check
      _
    $region35: #{tpu_custom_call.1} parent=1 // pred_check_branch
      %164 = sbr.rel (0) target = $region37
    $region36: #{tpu_custom_call.1} parent=1 // pred_region
      %165 = dma.done [#allocation5], 128
    $region37: #{tpu_custom_call.1} parent=1 // pred_fallthru
      _
    %166 = vsyncpa [#allocation4], 1
    %167 = vsyncpa [#allocation7], 1
    %168 = vsyncpa [#allocation5], 1

</llo_original>
